<compile_context>
chip_gen: v7x
topology: tpu7x:2x2x1
jax: 0.10.0
libtpu: 0.0.40
codegen_flags: <defaults>
</compile_context>

<pallas_src>
import math
import functools

import jax
import jax.numpy as jnp
from jax.experimental import pallas as pl
from jax.experimental.pallas import tpu as pltpu


def _round_up(a, b):
    return (a + b - 1) // b * b


_ROLL_MATCHES_JNP = None


def _roll_matches_jnp():
    """pltpu.roll is documented to follow jnp.roll semantics; verify once on-device with a
    tiny probe kernel so the butterfly cross-term pairing is robust either way."""
    global _ROLL_MATCHES_JNP
    if _ROLL_MATCHES_JNP is None:
        def probe(x_ref, o_ref):
            o_ref[...] = pltpu.roll(x_ref[...], shift=1, axis=1)

        x = jax.lax.broadcasted_iota(jnp.float32, (8, 128), 1)
        y = pl.pallas_call(
            probe, out_shape=jax.ShapeDtypeStruct((8, 128), jnp.float32))(x)
        if bool(jnp.array_equal(y, jnp.roll(x, 1, axis=1))):
            _ROLL_MATCHES_JNP = True
        elif bool(jnp.array_equal(y, jnp.roll(x, -1, axis=1))):
            _ROLL_MATCHES_JNP = False
        else:
            raise RuntimeError("unexpected pltpu.roll semantics")
    return _ROLL_MATCHES_JNP


def _butterfly_kernel(x_ref, w_ref, b_ref, o_ref, *, sizes, stack, n_ext, lanes,
                      n_pack, roll_matches_jnp):
    """x_ref: (TB, L)   packed input rows (n_pack original rows of width n_ext per lane row)
    w_ref: (len(sizes)*stack*3, L)   per-factor diag / upper / lower weight vectors
    b_ref: (1, stack*n_ext)          zero-padded bias
    o_ref: (TB, n_pack*stack*n_ext)  packed, stack-interleaved, bias-fused output rows."""
    L = lanes
    x = x_ref[...].astype(jnp.float32)
    for t in range(stack):
        y = x
        for i, s in enumerate(sizes):
            h = s // 2
            base = (i * stack + t) * 3
            d = w_ref[pl.ds(base + 0, 1), :]        # (1, L) A on top halves, D on bottom
            u = w_ref[pl.ds(base + 1, 1), :]        # (1, L) B, nonzero on top halves only
            lo = w_ref[pl.ds(base + 2, 1), :]       # (1, L) C, nonzero on bottom halves only
            # "pull right": out[p] = y[p + h]  (partner of a top-half position)
            # "pull left" : out[p] = y[p - h]  (partner of a bottom-half position)
            sh_right = (L - h) if roll_matches_jnp else h
            sh_left = h if roll_matches_jnp else (L - h)
            y_right = pltpu.roll(y, shift=sh_right, axis=1)
            y_left = pltpu.roll(y, shift=sh_left, axis=1)
            # top:  A*top + B*bot   ; bottom: D*bot + C*top   (exactly two nonzero terms)
            y = d * y + u * y_right + lo * y_left
        b_t = b_ref[:, pl.ds(t * n_ext, n_ext)]     # (1, n_ext)
        for r in range(n_pack):
            seg = y[:, r * n_ext:(r + 1) * n_ext]   # this stack's result for packed row r
            col = (r * stack + t) * n_ext           # interleave stacks within each row
            o_ref[:, pl.ds(col, n_ext)] = (seg + b_t).astype(o_ref.dtype)


def block2x2_diag_product_rectangular(x, ABCD_list, bias, out_size, *, block_rows=256):
    """Forward of Block2x2DiagProductRectangular (real, tied_weight=True).

    x:          (..., in_size)
    ABCD_list:  list of m arrays, factor i has shape (stack, 2, 2, size_i // 2)
                (module storage order, i.e. decreasing size for decreasing_size=True)
    bias:       (out_size,) or None
    """
    in_size = x.shape[-1]
    batch_shape = x.shape[:-1]
    B = int(math.prod(batch_shape))
    sizes_app = tuple(int(a.shape[-1]) * 2 for a in reversed(ABCD_list))  # application order
    N = max(sizes_app)                                  # in_size_extended
    stack = int(ABCD_list[0].shape[0])
    assert in_size <= N and out_size <= stack * N

    k = max(1, 128 // N)                                # packed rows per 128-lane row
    L = k * N
    Bp = (B + k - 1) // k
    TB = min(_round_up(block_rows, 8), _round_up(Bp, 8))
    Bp_pad = _round_up(Bp, TB)

    # Pad + pack the input: (B, in_size) -> (Bp_pad, L), zero filled (pad rows & columns).
    x2 = x.reshape(B, in_size)
    x2 = jnp.pad(x2, ((0, Bp_pad * k - B), (0, N - in_size)))
    x_packed = x2.reshape(Bp_pad, L)

    # Per-factor weight vectors in the packed lane layout (built once, tiny).
    w_rows = []
    for a in reversed(ABCD_list):                       # (stack, 2, 2, s//2)
        a = a.astype(jnp.float32)
        s = 2 * int(a.shape[-1])
        A, Bw, C, D = a[:, 0, 0, :], a[:, 0, 1, :], a[:, 1, 0, :], a[:, 1, 1, :]
        z = jnp.zeros_like(A)
        reps = (1, L // s)
        diag = jnp.tile(jnp.concatenate([A, D], axis=-1), reps)    # (stack, L)
        upper = jnp.tile(jnp.concatenate([Bw, z], axis=-1), reps)  # B on top halves
        lower = jnp.tile(jnp.concatenate([z, C], axis=-1), reps)   # C on bottom halves
        w_rows.append(jnp.stack([diag, upper, lower], axis=1))     # (stack, 3, L)
    W = jnp.stack(w_rows, axis=0).reshape(len(sizes_app) * stack * 3, L)

    b_full = jnp.zeros((stack * N,), jnp.float32)
    if bias is not None:
        b_full = b_full.at[:out_size].set(bias.astype(jnp.float32))
    b_full = b_full.reshape(1, stack * N)

    kernel = functools.partial(
        _butterfly_kernel, sizes=sizes_app, stack=stack, n_ext=N, lanes=L,
        n_pack=k, roll_matches_jnp=_roll_matches_jnp())

    out_packed = pl.pallas_call(
        kernel,
        out_shape=jax.ShapeDtypeStruct((Bp_pad, stack * L), x.dtype),
        grid=(Bp_pad // TB,),
        in_specs=[
            pl.BlockSpec((TB, L), lambda i: (i, 0)),            # packed input rows
            pl.BlockSpec((W.shape[0], L), lambda i: (0, 0)),    # replicated weight vectors
            pl.BlockSpec((1, stack * N), lambda i: (0, 0)),     # replicated bias
        ],
        out_specs=pl.BlockSpec((TB, stack * L), lambda i: (i, 0)),
        compiler_params=pltpu.CompilerParams(
            dimension_semantics=("parallel",)),
    )(x_packed, W, b_full)

    # Unpack: (Bp_pad, k*stack*N) -> (Bp_pad*k, stack*N) is a free, contiguous reshape.
    out = out_packed.reshape(Bp_pad * k, stack * N)[:B, :out_size]
    return out.reshape(batch_shape + (out_size,))


def reference_forward(x, ABCD_list, bias, out_size):
    """Pure-JAX mirror of the PyTorch module's forward (real, tied_weight=True)."""
    in_size = x.shape[-1]
    batch_shape = x.shape[:-1]
    N = max(int(a.shape[-1]) * 2 for a in ABCD_list)
    stack = int(ABCD_list[0].shape[0])
    y = x
    if in_size != N:
        y = jnp.concatenate(
            [y, jnp.zeros(batch_shape + (N - in_size,), y.dtype)], axis=-1)
    y = jnp.broadcast_to(y[None], (stack,) + y.shape)             # (stack, ..., N)
    for a in ABCD_list[::-1]:
        s = int(a.shape[-1]) * 2
        shp = y.shape
        yv = y.reshape(stack, -1, 1, 2, s // 2)
        y = (a[:, None] * yv).sum(axis=-2).reshape(shp)
    y = jnp.moveaxis(y, 0, -2).reshape(batch_shape + (stack * N,))[..., :out_size]
    if bias is not None:
        y = y + bias
    return y


if __name__ == "__main__":
    root = jax.random.PRNGKey(0)

    def make_params(key, in_size, out_size):
        m = (in_size - 1).bit_length()
        N = 1 << m
        stack = -(-out_size // N)
        in_sizes = [N >> i for i in range(m)]           # decreasing_size=True storage order
        keys = jax.random.split(key, m + 1)
        scale = 1.0 / math.sqrt(2.0)
        ABCD_list = [scale * jax.random.normal(keys[i], (stack, 2, 2, s // 2), jnp.float32)
                     for i, s in enumerate(in_sizes)]
        bound = 1.0 / math.sqrt(in_size)
        bias = jax.random.uniform(keys[-1], (out_size,), jnp.float32, -bound, bound)
        return ABCD_list, bias

    cases = [
        # (batch_shape, in_size, out_size)
        ((2, 4, 16), 16, 24),     # power-of-2 in_size, stack=2, out_size slicing
        ((3, 40), 12, 40),        # in_size padded 12 -> 16, stack=3, row padding
        ((2, 2048), 16, 32),      # larger batch -> multi-step "parallel" grid
    ]
    for idx, (bshape, in_size, out_size) in enumerate(cases):
        kp, kx = jax.random.split(jax.random.fold_in(root, idx))
        ABCD_list, bias = make_params(kp, in_size, out_size)
        x = jax.random.normal(kx, bshape + (in_size,), jnp.float32)

        out = block2x2_diag_product_rectangular(x, ABCD_list, bias, out_size)
        out = jax.block_until_ready(out)
        ref = reference_forward(x, ABCD_list, bias, out_size)

        assert out.shape == bshape + (out_size,), (out.shape, bshape + (out_size,))
        assert out.dtype == x.dtype
        err = float(jnp.max(jnp.abs(out - ref)))
        assert jnp.allclose(out, ref, atol=1e-5, rtol=1e-5), \
            f"case {idx}: max abs err {err}"

    print("KERNEL_OK")
</pallas_src>

<mosaic_0001>
module attributes {stable_mosaic.version = 11 : i64} {
  func.func @probe(%arg0: memref<8x128xf32, #tpu.memory_space<vmem>>, %arg1: memref<8x128xf32, #tpu.memory_space<vmem>>) attributes {dimension_semantics = [], scalar_prefetch = 0 : i64, scratch_operands = 0 : i64, tpu.core_type = #tpu.core_type<tc>} {
    %c0 = arith.constant 0 : index
    %c0_0 = arith.constant 0 : index
    %0 = vector.load %arg0[%c0, %c0_0] : memref<8x128xf32, #tpu.memory_space<vmem>>, vector<8x128xf32>
    %c1_i32 = arith.constant 1 : i32
    %1 = tpu.dynamic_rotate %0 by %c1_i32 dim 1 : vector<8x128xf32>, i32 -> vector<8x128xf32>
    %c0_1 = arith.constant 0 : index
    %c0_2 = arith.constant 0 : index
    %2 = vector.load %arg1[%c0_1, %c0_2] : memref<8x128xf32, #tpu.memory_space<vmem>>, vector<8x128xf32>
    tpu.vector_store %arg1[%c0_1, %c0_2], %1 {strides = array<i32>} : memref<8x128xf32, #tpu.memory_space<vmem>>, vector<8x128xf32>,
    return
  }
}

</mosaic_0001>

<llo_original>
// kernel: tpu_custom_call.1
$region0: #{tpu_custom_call.1}
  #allocation0 [shape = 'u32[]', space=smem, size = 0x4, offset = 0x4, fixed_abs, tag = 'smem constant byte address 0x4 - core index']
  #allocation1 [shape = 'u32[144,128]{1,0:T(1,128)}', space=vmem, size = 0x12000, scoped, tag = 'internal scratch']
  %s0 = inlined_call_operand.hbm [shape: f32[8,128], index: 0, kind: input, shape index: {}]
  %s1 = inlined_call_operand.hbm [shape: f32[8,128], index: 1, kind: output, shape index: {}]
  %s2 = sld [smem:[#allocation0]]
  $region18: #{tpu_custom_call.1} parent=0
    _
  %s4 = ssub.s32 1, %s2
  %s5 = scalar_select 0, %s4, %s2
  $region1: #{tpu_custom_call.1} parent=0
    #allocation2 [shape = 'u8[4096]{0}', space=vmem, size = 0x1000, scoped, tag = 'input window, operand 0, single buffered']
    #allocation3 [shape = 's32[1]{0}', space=sflag, size = 0x4, scoped, tag = 'scoped memory for tpu_custom_call.1']
    #allocation4 [shape = 's32[1]{0}', space=sflag, size = 0x4, scoped, tag = 'scoped memory for tpu_custom_call.1']
    #allocation5 [shape = 'u8[4096]{0}', space=vmem, size = 0x1000, scoped, tag = 'output window, operand 0, single buffered']
    %6 = vsyncpa [#allocation3], 0
    %7 = vsyncpa [#allocation4], 0
    // Predicated region
    $region2: #{tpu_custom_call.1} parent=1 // pred_check
      _
    $region3: #{tpu_custom_call.1} parent=1 // pred_check_branch
      %9 = sbr.rel (0) target = $region5
    $region4: #{tpu_custom_call.1} parent=1 // pred_region
      %s11 = ssub.s32 128, 128
      %12 = vsyncadd [#allocation3], %s11
      %s14 = sshll.u32 [#allocation2], 4
      %s15 = int_to_ptr.vmem [resolvable:$true] %s14
      %17 = dma.hbm_to_vmem [thread:$0]  %s0, 128, %s15, [#allocation3]
    $region5: #{tpu_custom_call.1} parent=1 // pred_fallthru
      _
    // Predicated region
    $region6: #{tpu_custom_call.1} parent=1 // pred_check
      _
    $region7: #{tpu_custom_call.1} parent=1 // pred_check_branch
      %19 = sbr.rel (0) target = $region9
    $region8: #{tpu_custom_call.1} parent=1 // pred_region
      %20 = dma.done [#allocation3], 128
    $region9: #{tpu_custom_call.1} parent=1 // pred_fallthru
      _
    %v21 = vld [vmem:[#allocation2] sm:$0xff]
    %22 = vrot.lane.b32.xlu0 %v21, 1
    %v23 = vpop.permute.xlu0 %22
    %24 = vst [vmem:[#allocation5] sm:$0xff] %v23
    // Predicated region
    $region10: #{tpu_custom_call.1} parent=1 // pred_check
      _
    $region11: #{tpu_custom_call.1} parent=1 // pred_check_branch
      %26 = sbr.rel (0) target = $region13
    $region12: #{tpu_custom_call.1} parent=1 // pred_region
      %s28 = ssub.s32 128, 128
      %29 = vsyncadd [#allocation4], %s28
      %s31 = sshll.u32 [#allocation5], 4
      %s32 = int_to_ptr.vmem [resolvable:$true] %s31
      %34 = dma.vmem_to_hbm [thread:$0]  %s32, 128, %s1, [#allocation4]
    $region13: #{tpu_custom_call.1} parent=1 // pred_fallthru
      _
    // Predicated region
    $region14: #{tpu_custom_call.1} parent=1 // pred_check
      _
    $region15: #{tpu_custom_call.1} parent=1 // pred_check_branch
      %36 = sbr.rel (0) target = $region17
    $region16: #{tpu_custom_call.1} parent=1 // pred_region
      %37 = dma.done [#allocation4], 128
    $region17: #{tpu_custom_call.1} parent=1 // pred_fallthru
      _
    %38 = vsyncpa [#allocation3], 1
    %39 = vsyncpa [#allocation4], 1

</llo_original>
